<compile_context>
chip_gen: v6e
topology: v6e:2x2x1
jax: 0.10.0
libtpu: 0.0.40
codegen_flags: <defaults>
</compile_context>

<pallas_src>
import jax
import jax.numpy as jnp
from jax.experimental import pallas as pl
from jax.experimental.pallas import tpu as pltpu

_LN_EPS = 1e-5
_BUFFERED = getattr(pl, "Buffered", None)


def _round_up(x, m):
    return ((x + m - 1) // m) * m


def _vmem_capacity_bytes():
    # Per-generation VMEM (v5e/v6e: 128 MiB, v7x: 64 MiB per TC).  Fall back to
    # the most conservative value if the query is unavailable.
    try:
        return int(pltpu.get_tpu_info().vmem_capacity_bytes)
    except Exception:
        return 64 * 1024 * 1024


def _align_rows(t):
    # Prefer MXU-full-height row tiles: multiples of 256 (also a multiple of
    # 128 for v5e's 128x128 MXU); multiples of 8 only for tiny problems.
    if t >= 256:
        return (t // 256) * 256
    if t >= 128:
        return 128
    return max(8, (t // 8) * 8)


# ---------------------------------------------------------------------------
# Kernels
# ---------------------------------------------------------------------------
def _seg_merging_kernel(x_ref, w_ref, b_ref, o_ref):
    # x_ref: (tm, D_in)   w_ref: (D_in, D) with the LN affine pre-folded
    # b_ref: (1, D) f32   o_ref: (tm, D)
    x = x_ref[...].astype(jnp.float32)
    inv_n = jnp.float32(1.0 / x.shape[-1])
    mean = jnp.sum(x, axis=-1, keepdims=True) * inv_n
    xc = x - mean
    var = jnp.sum(xc * xc, axis=-1, keepdims=True) * inv_n   # two-pass variance
    y = xc * jax.lax.rsqrt(var + _LN_EPS)
    out = jnp.dot(y.astype(w_ref.dtype), w_ref[...],
                  preferred_element_type=jnp.float32)
    o_ref[...] = (out + b_ref[...].astype(jnp.float32)).astype(o_ref.dtype)


def _seg_merging_kernel_ktiled(xf_ref, xk_ref, w_ref, b_ref, o_ref,
                               mean_ref, rstd_ref, acc_ref):
    # Grid = (row tiles, K tiles over D_in).
    #  xf_ref: (tm, D_in) full row, block index constant over k (stats only,
    #          DMA'd once per row tile);  xk_ref: (tm, tk) streamed chunk;
    #  w_ref: (tk, D) streamed weight slab;  acc_ref: (tm, D) f32 accumulator.
    k = pl.program_id(1)

    @pl.when(k == 0)
    def _():
        x = xf_ref[...].astype(jnp.float32)
        inv_n = jnp.float32(1.0 / x.shape[-1])
        mean = jnp.sum(x, axis=-1, keepdims=True) * inv_n
        xc = x - mean
        var = jnp.sum(xc * xc, axis=-1, keepdims=True) * inv_n
        mean_ref[...] = mean
        rstd_ref[...] = jax.lax.rsqrt(var + _LN_EPS)
        acc_ref[...] = jnp.zeros_like(acc_ref)

    yk = (xk_ref[...].astype(jnp.float32) - mean_ref[...]) * rstd_ref[...]
    acc_ref[...] += jnp.dot(yk.astype(w_ref.dtype), w_ref[...],
                            preferred_element_type=jnp.float32)

    @pl.when(k == pl.num_programs(1) - 1)
    def _():
        o_ref[...] = (acc_ref[...] + b_ref[...].astype(jnp.float32)
                      ).astype(o_ref.dtype)


# ---------------------------------------------------------------------------
# Parameters
# ---------------------------------------------------------------------------
def init_params(key, d_model, win_size, dtype=jnp.float32):
    """Raw parameters matching the PyTorch module (LayerNorm + Linear)."""
    d_in = win_size * d_model
    k_w, k_b = jax.random.split(key)
    bound = 1.0 / jnp.sqrt(d_in)
    weight = jax.random.uniform(k_w, (d_in, d_model), dtype, -bound, bound)
    bias = jax.random.uniform(k_b, (d_model,), dtype, -bound, bound)
    gamma = jnp.ones((d_in,), dtype)   # LayerNorm weight
    beta = jnp.zeros((d_in,), dtype)   # LayerNorm bias
    return gamma, beta, weight, bias


def prepare_params(raw_params, *, use_bf16_matmul=True):
    """One-time parameter prep: fold the LayerNorm affine into the projection
    (w' = gamma[:,None] * W, b' = bias + beta @ W) and cast the weight to its
    MXU dtype.  Mathematically identical to norm(x)*gamma+beta followed by the
    Linear; removes the per-tile affine and the per-call weight convert."""
    gamma, beta, weight, bias = raw_params
    w32 = weight.astype(jnp.float32)
    w_folded = gamma.astype(jnp.float32)[:, None] * w32
    b_folded = bias.astype(jnp.float32) + beta.astype(jnp.float32) @ w32
    w_folded = w_folded.astype(jnp.bfloat16 if use_bf16_matmul else weight.dtype)
    return w_folded, b_folded.astype(jnp.float32)


# ---------------------------------------------------------------------------
# Forward
# ---------------------------------------------------------------------------
def seg_merging_forward(x, prepared_params, win_size, *, tm=None, tk=None,
                        force_k_tiling=False, x_buffer_count=2):
    """x: [B, ts_d, seg_num, d_model] -> [B, ts_d, ceil(seg_num/win), d_model].

    prepared_params = prepare_params(raw): (gamma-folded weight, folded bias).
    """
    weight, bias = prepared_params
    B, T, S, D = x.shape
    W = win_size
    D_in = W * D
    assert weight.shape == (D_in, D), (weight.shape, (D_in, D))

    # --- glue: pad seg axis by repeating the last pad_num segments ----------
    pad_num = S % W
    if pad_num != 0:
        pad_num = W - pad_num
        x = jnp.concatenate([x, x[:, :, -pad_num:, :]], axis=-2)
    merged = x.shape[2] // W

    # strided gather + feature concat == contiguous reshape (free in XLA).
    M = B * T * merged
    x2d = x.reshape(M, D_in)
    bias2d = bias.reshape(1, D).astype(jnp.float32)

    bx = x2d.dtype.itemsize
    bw = weight.dtype.itemsize
    bo = x.dtype.itemsize

    # --- per-generation VMEM budget ------------------------------------------
    vmem_cap = _vmem_capacity_bytes()
    budget = vmem_cap // 2                                    # working-set budget
    vmem_limit = int(min(vmem_cap * 3 // 4, vmem_cap - (4 << 20)))

    have_pm = _BUFFERED is not None
    const_bufs = 1 if have_pm else 2          # weight/bias single-buffered if possible

    # --- row tile -------------------------------------------------------------
    if tm is None:
        tm = 1024 if vmem_cap >= (96 << 20) else 512          # 128 MiB vs 64 MiB parts
    tm_cap = _round_up(M, 8)                                  # one padded tile if small
    tm_eff = min(_round_up(int(tm), 8), tm_cap)
    if tm_eff < tm_cap:
        tm_eff = _align_rows(tm_eff)

    def _need_fused(t, xb):
        return (xb * t * D_in * bx                 # x pipeline buffers
                + 2 * t * D * bo                   # out double buffer
                + const_bufs * D_in * D * bw       # resident weight
                + const_bufs * D * 4               # bias
                + t * D_in * 4 + t * D_in * bw     # f32 LN tile + matmul-dtype copy
                + t * D * 4)                       # f32 matmul result

    # K-tile only when the resident weight would eat the budget (or forced).
    use_kt = force_k_tiling or (const_bufs * D_in * D * bw > budget // 2)

    if not use_kt:
        while tm_eff > 8 and _need_fused(tm_eff, 2) > budget:
            tm_eff = max(8, _align_rows(tm_eff // 2))
        # Optional deeper x pipeline (only if headroom exists; see review item).
        x_bufs = 2
        if have_pm and int(x_buffer_count) > 2 and \
                _need_fused(tm_eff, int(x_buffer_count)) <= budget:
            x_bufs = int(x_buffer_count)

        grid = (pl.cdiv(M, tm_eff),)
        cost = pl.CostEstimate(
            flops=int(2 * M * D_in * D + 7 * M * D_in),
            transcendentals=int(M),
            bytes_accessed=int(M * D_in * bx + M * D * bo + D_in * D * bw + D * 4),
        )

        def _call_fused(with_pm):
            pm_c = {"pipeline_mode": _BUFFERED(1)} if (with_pm and have_pm) else {}
            pm_x = ({"pipeline_mode": _BUFFERED(x_bufs)}
                    if (with_pm and have_pm and x_bufs != 2) else {})
            return pl.pallas_call(
                _seg_merging_kernel,
                out_shape=jax.ShapeDtypeStruct((M, D), x.dtype),
                grid_spec=pltpu.PrefetchScalarGridSpec(
                    num_scalar_prefetch=0,
                    grid=grid,
                    in_specs=[
                        pl.BlockSpec((tm_eff, D_in), lambda i: (i, 0), **pm_x),
                        pl.BlockSpec((D_in, D), lambda i: (0, 0), **pm_c),
                        pl.BlockSpec((1, D), lambda i: (0, 0), **pm_c),
                    ],
                    out_specs=pl.BlockSpec((tm_eff, D), lambda i: (i, 0)),
                ),
                compiler_params=pltpu.CompilerParams(
                    dimension_semantics=("parallel",),
                    vmem_limit_bytes=vmem_limit,
                ),
                cost_estimate=cost,
            )(x2d, weight, bias2d)

        try:
            out2d = _call_fused(True)
        except Exception:   # older jax without pipeline_mode / Buffered(1) support
            out2d = _call_fused(False)

    else:
        # ---- K-tiled fallback: stream the weight in (tk, D) slabs ------------
        if tk is None:
            max_w_bytes = max(budget // 4, 2 * 128 * D * bw)
            tk_eff = D_in
            cand = (D_in // 128) * 128
            while cand >= 128:
                if D_in % cand == 0 and 2 * cand * D * bw <= max_w_bytes:
                    tk_eff = cand
                    break
                cand -= 128
        else:
            tk_eff = int(tk)
        assert D_in % tk_eff == 0, "K tile must divide win_size*d_model"
        assert tk_eff % 128 == 0 or tk_eff == D_in, "K tile must be lane-aligned"
        nk = D_in // tk_eff

        def _need_kt(t):
            return (2 * t * D_in * bx            # full-row x (stats)
                    + 2 * t * tk_eff * bx        # streamed x chunk
                    + 2 * tk_eff * D * bw        # streamed weight slab
                    + const_bufs * D * 4         # bias
                    + 2 * t * D * bo             # out
                    + t * D * 4                  # f32 accumulator scratch
                    + 2 * t * 4                  # mean / rstd scratch
                    + t * D_in * 4               # f32 stats intermediate
                    + t * tk_eff * (4 + bw))     # f32 chunk + matmul-dtype copy

        while tm_eff > 8 and _need_kt(tm_eff) > budget:
            tm_eff = max(8, _align_rows(tm_eff // 2))

        grid = (pl.cdiv(M, tm_eff), nk)
        cost = pl.CostEstimate(
            flops=int(2 * M * D_in * D + 7 * M * D_in),
            transcendentals=int(M),
            bytes_accessed=int(2 * M * D_in * bx + M * D * bo
                               + grid[0] * D_in * D * bw + D * 4),
        )

        def _call_kt(with_pm):
            pm_c = {"pipeline_mode": _BUFFERED(1)} if (with_pm and have_pm) else {}
            return pl.pallas_call(
                _seg_merging_kernel_ktiled,
                out_shape=jax.ShapeDtypeStruct((M, D), x.dtype),
                grid_spec=pltpu.PrefetchScalarGridSpec(
                    num_scalar_prefetch=0,
                    grid=grid,
                    in_specs=[
                        pl.BlockSpec((tm_eff, D_in), lambda i, k: (i, 0)),
                        pl.BlockSpec((tm_eff, tk_eff), lambda i, k: (i, k)),
                        pl.BlockSpec((tk_eff, D), lambda i, k: (k, 0)),
                        pl.BlockSpec((1, D), lambda i, k: (0, 0), **pm_c),
                    ],
                    out_specs=pl.BlockSpec((tm_eff, D), lambda i, k: (i, 0)),
                    scratch_shapes=[
                        pltpu.VMEM((tm_eff, 1), jnp.float32),
                        pltpu.VMEM((tm_eff, 1), jnp.float32),
                        pltpu.VMEM((tm_eff, D), jnp.float32),
                    ],
                ),
                compiler_params=pltpu.CompilerParams(
                    dimension_semantics=("parallel", "arbitrary"),
                    vmem_limit_bytes=vmem_limit,
                ),
                cost_estimate=cost,
            )(x2d, x2d, weight, bias2d)

        try:
            out2d = _call_kt(True)
        except Exception:   # older jax without pipeline_mode / Buffered(1) support
            out2d = _call_kt(False)

    return out2d.reshape(B, T, merged, D)


# ---------------------------------------------------------------------------
# Reference & self-test
# ---------------------------------------------------------------------------
def _reference(x, raw_params, win_size):
    gamma, beta, weight, bias = raw_params
    W = win_size
    pad_num = x.shape[2] % W
    if pad_num != 0:
        pad_num = W - pad_num
        x = jnp.concatenate([x, x[:, :, -pad_num:, :]], axis=-2)
    segs = [x[:, :, i::W, :] for i in range(W)]
    xm = jnp.concatenate(segs, axis=-1)
    mean = jnp.mean(xm, axis=-1, keepdims=True)
    var = jnp.mean((xm - mean) ** 2, axis=-1, keepdims=True)
    xn = (xm - mean) / jnp.sqrt(var + _LN_EPS)
    y = xn * gamma + beta
    return y @ weight + bias


if __name__ == "__main__":
    key = jax.random.PRNGKey(0)

    # (B, T, S, D, win_size, force_k_tiling, tk, f32 tol)
    #  case 0: repeat-pad branch, evenly tiled M
    #  case 1: ragged (padded) last row tile
    #  case 2: forced K-tiled weight-streaming path (accumulator kernel)
    cases = [
        (2, 4, 7, 32, 2, False, None, 1e-4),
        (2, 3, 5, 32, 4, False, None, 1e-4),
        (2, 2, 4, 128, 2, True, 128, 5e-3),
    ]

    for idx, (B, T, S, D, win_size, force_kt, tk, f32_tol) in enumerate(cases):
        k_x, k_p, key = jax.random.split(key, 3)
        x = jax.random.normal(k_x, (B, T, S, D), jnp.float32)
        raw = init_params(k_p, D, win_size)
        ref = _reference(x, raw, win_size)

        # Exact-semantics path (f32 matmul), tight tolerance.
        p_f32 = prepare_params(raw, use_bf16_matmul=False)
        out_f32 = jax.block_until_ready(
            seg_merging_forward(x, p_f32, win_size,
                                force_k_tiling=force_kt, tk=tk))
        assert out_f32.shape == ref.shape, (out_f32.shape, ref.shape)
        assert jnp.allclose(out_f32, ref, atol=f32_tol, rtol=f32_tol), \
            f"f32 mismatch, case {idx}"

        # Fast path (bf16 MXU matmul, f32 accumulation), bf16-level tolerance.
        p_bf16 = prepare_params(raw, use_bf16_matmul=True)
        out_bf16 = jax.block_until_ready(
            seg_merging_forward(x, p_bf16, win_size,
                                force_k_tiling=force_kt, tk=tk))
        assert out_bf16.shape == ref.shape, (out_bf16.shape, ref.shape)
        assert jnp.allclose(out_bf16, ref, atol=3e-2, rtol=3e-2), \
            f"bf16 mismatch, case {idx}"

    print("KERNEL_OK")
</pallas_src>

<mosaic_0001>
module attributes {stable_mosaic.version = 11 : i64} {
  func.func @_seg_merging_kernel(%arg0: i32, %arg1: memref<32x64xf32, #tpu.memory_space<vmem>>, %arg2: memref<64x32xf32, #tpu.memory_space<vmem>>, %arg3: memref<1x32xf32, #tpu.memory_space<vmem>>, %arg4: memref<32x32xf32, #tpu.memory_space<vmem>>) attributes {dimension_semantics = [#tpu.dimension_semantics<parallel>], iteration_bounds = array<i64: 1>, scalar_prefetch = 0 : i64, scratch_operands = 0 : i64, tpu.core_type = #tpu.core_type<tc>, window_params = [{transform_indices = @transform_0, window_bounds = array<i64: 32, 64>}, {pipeline_mode = #tpu.pipeline_mode<synchronous>, transform_indices = @transform_1, window_bounds = array<i64: 64, 32>}, {pipeline_mode = #tpu.pipeline_mode<synchronous>, transform_indices = @transform_2, window_bounds = array<i64: 1, 32>}, {transform_indices = @transform_3, window_bounds = array<i64: 32, 32>}]} {
    %c0 = arith.constant 0 : index
    %c0_0 = arith.constant 0 : index
    %0 = vector.load %arg1[%c0, %c0_0] : memref<32x64xf32, #tpu.memory_space<vmem>>, vector<32x64xf32>
    %cst = arith.constant dense<0.000000e+00> : vector<32xf32>
    %1 = vector.multi_reduction <add>, %0, %cst [1] : vector<32x64xf32> to vector<32xf32>
    %2 = vector.shape_cast %1 : vector<32xf32> to vector<32x1xf32>
    %cst_1 = arith.constant 1.562500e-02 : f32
    %3 = vector.broadcast %cst_1 : f32 to vector<32x1xf32>
    %4 = arith.mulf %2, %3 : vector<32x1xf32>
    %5 = vector.broadcast %4 : vector<32x1xf32> to vector<32x64xf32>
    %6 = arith.subf %0, %5 : vector<32x64xf32>
    %7 = arith.mulf %6, %6 : vector<32x64xf32>
    %cst_2 = arith.constant dense<0.000000e+00> : vector<32xf32>
    %8 = vector.multi_reduction <add>, %7, %cst_2 [1] : vector<32x64xf32> to vector<32xf32>
    %9 = vector.shape_cast %8 : vector<32xf32> to vector<32x1xf32>
    %cst_3 = arith.constant 1.562500e-02 : f32
    %10 = vector.broadcast %cst_3 : f32 to vector<32x1xf32>
    %11 = arith.mulf %9, %10 : vector<32x1xf32>
    %cst_4 = arith.constant 9.99999974E-6 : f32
    %12 = vector.broadcast %cst_4 : f32 to vector<32x1xf32>
    %13 = arith.addf %11, %12 : vector<32x1xf32>
    %14 = math.rsqrt %13 : vector<32x1xf32>
    %15 = vector.broadcast %14 : vector<32x1xf32> to vector<32x64xf32>
    %16 = arith.mulf %6, %15 : vector<32x64xf32>
    %c0_5 = arith.constant 0 : index
    %c0_6 = arith.constant 0 : index
    %17 = vector.load %arg2[%c0_5, %c0_6] : memref<64x32xf32, #tpu.memory_space<vmem>>, vector<64x32xf32>
    %cst_7 = arith.constant dense<0.000000e+00> : vector<32x32xf32>
    %18 = tpu.matmul %16, %17, %cst_7 {dimension_numbers = #tpu.dot_dimension_numbers<[1], [0], [0], [1], [0, 0, 1, 1], [], []>} : vector<32x64xf32>, vector<64x32xf32>, vector<32x32xf32> -> vector<32x32xf32>
    %c0_8 = arith.constant 0 : index
    %c0_9 = arith.constant 0 : index
    %19 = vector.load %arg3[%c0_8, %c0_9] : memref<1x32xf32, #tpu.memory_space<vmem>>, vector<1x32xf32>
    %20 = vector.broadcast %19 : vector<1x32xf32> to vector<32x32xf32>
    %21 = arith.addf %18, %20 : vector<32x32xf32>
    %c0_10 = arith.constant 0 : index
    %c0_11 = arith.constant 0 : index
    %22 = vector.load %arg4[%c0_10, %c0_11] : memref<32x32xf32, #tpu.memory_space<vmem>>, vector<32x32xf32>
    tpu.vector_store %arg4[%c0_10, %c0_11], %21 {strides = array<i32>} : memref<32x32xf32, #tpu.memory_space<vmem>>, vector<32x32xf32>,
    return
  }
  func.func @transform_0(%arg0: i32) -> (i32, i32) {
    %c0_i32 = arith.constant 0 : i32
    %c0_i32_0 = arith.constant 0 : i32
    return %arg0, %c0_i32 : i32, i32
  }
  func.func @transform_1(%arg0: i32) -> (i32, i32) {
    %c0_i32 = arith.constant 0 : i32
    %c0_i32_0 = arith.constant 0 : i32
    %c0_i32_1 = arith.constant 0 : i32
    return %c0_i32, %c0_i32_0 : i32, i32
  }
  func.func @transform_2(%arg0: i32) -> (i32, i32) {
    %c0_i32 = arith.constant 0 : i32
    %c0_i32_0 = arith.constant 0 : i32
    %c0_i32_1 = arith.constant 0 : i32
    return %c0_i32, %c0_i32_0 : i32, i32
  }
  func.func @transform_3(%arg0: i32) -> (i32, i32) {
    %c0_i32 = arith.constant 0 : i32
    %c0_i32_0 = arith.constant 0 : i32
    return %arg0, %c0_i32 : i32, i32
  }
}

module attributes {stable_mosaic.version = 11 : i64} {
  func.func @_seg_merging_kernel(%arg0: i32, %arg1: memref<32x64xf32, #tpu.memory_space<vmem>>, %arg2: memref<64x32xf32, #tpu.memory_space<vmem>>, %arg3: memref<1x32xf32, #tpu.memory_space<vmem>>, %arg4: memref<32x32xf32, #tpu.memory_space<vmem>>) attributes {dimension_semantics = [#tpu.dimension_semantics<parallel>], iteration_bounds = array<i64: 1>, scalar_prefetch = 0 : i64, scratch_operands = 0 : i64, tpu.core_type = #tpu.core_type<tc>, window_params = [{transform_indices = @transform_0, window_bounds = array<i64: 32, 64>}, {pipeline_mode = #tpu.pipeline_mode<synchronous>, transform_indices = @transform_1, window_bounds = array<i64: 64, 32>}, {pipeline_mode = #tpu.pipeline_mode<synchronous>, transform_indices = @transform_2, window_bounds = array<i64: 1, 32>}, {transform_indices = @transform_3, window_bounds = array<i64: 32, 32>}]} {
    %c0 = arith.constant 0 : index
    %c0_0 = arith.constant 0 : index
    %0 = vector.load %arg1[%c0, %c0_0] : memref<32x64xf32, #tpu.memory_space<vmem>>, vector<32x64xf32>
    %cst = arith.constant dense<0.000000e+00> : vector<32xf32>
    %1 = vector.multi_reduction <add>, %0, %cst [1] : vector<32x64xf32> to vector<32xf32>
    %2 = vector.shape_cast %1 : vector<32xf32> to vector<32x1xf32>
    %cst_1 = arith.constant 1.562500e-02 : f32
    %3 = vector.broadcast %cst_1 : f32 to vector<32x1xf32>
    %4 = arith.mulf %2, %3 : vector<32x1xf32>
    %5 = vector.broadcast %4 : vector<32x1xf32> to vector<32x64xf32>
    %6 = arith.subf %0, %5 : vector<32x64xf32>
    %7 = arith.mulf %6, %6 : vector<32x64xf32>
    %cst_2 = arith.constant dense<0.000000e+00> : vector<32xf32>
    %8 = vector.multi_reduction <add>, %7, %cst_2 [1] : vector<32x64xf32> to vector<32xf32>
    %9 = vector.shape_cast %8 : vector<32xf32> to vector<32x1xf32>
    %cst_3 = arith.constant 1.562500e-02 : f32
    %10 = vector.broadcast %cst_3 : f32 to vector<32x1xf32>
    %11 = arith.mulf %9, %10 : vector<32x1xf32>
    %cst_4 = arith.constant 9.99999974E-6 : f32
    %12 = vector.broadcast %cst_4 : f32 to vector<32x1xf32>
    %13 = arith.addf %11, %12 : vector<32x1xf32>
    %14 = math.rsqrt %13 : vector<32x1xf32>
    %15 = vector.broadcast %14 : vector<32x1xf32> to vector<32x64xf32>
    %16 = arith.mulf %6, %15 : vector<32x64xf32>
    %c0_5 = arith.constant 0 : index
    %c0_6 = arith.constant 0 : index
    %17 = vector.load %arg2[%c0_5, %c0_6] : memref<64x32xf32, #tpu.memory_space<vmem>>, vector<64x32xf32>
    %cst_7 = arith.constant dense<0.000000e+00> : vector<32x32xf32>
    %18 = tpu.matmul %16, %17, %cst_7 {dimension_numbers = #tpu.dot_dimension_numbers<[1], [0], [0], [1], [0, 0, 1, 1], [], []>} : vector<32x64xf32>, vector<64x32xf32>, vector<32x32xf32> -> vector<32x32xf32>
    %c0_8 = arith.constant 0 : index
    %c0_9 = arith.constant 0 : index
    %19 = vector.load %arg3[%c0_8, %c0_9] : memref<1x32xf32, #tpu.memory_space<vmem>>, vector<1x32xf32>
    %20 = vector.broadcast %19 : vector<1x32xf32> to vector<32x32xf32>
    %21 = arith.addf %18, %20 : vector<32x32xf32>
    %c0_10 = arith.constant 0 : index
    %c0_11 = arith.constant 0 : index
    %22 = vector.load %arg4[%c0_10, %c0_11] : memref<32x32xf32, #tpu.memory_space<vmem>>, vector<32x32xf32>
    tpu.vector_store %arg4[%c0_10, %c0_11], %21 {strides = array<i32>} : memref<32x32xf32, #tpu.memory_space<vmem>>, vector<32x32xf32>,
    return
  }
  func.func @transform_0(%arg0: i32) -> (i32, i32) {
    %c0_i32 = arith.constant 0 : i32
    %c0_i32_0 = arith.constant 0 : i32
    return %arg0, %c0_i32 : i32, i32
  }
  func.func @transform_1(%arg0: i32) -> (i32, i32) {
    %c0_i32 = arith.constant 0 : i32
    %c0_i32_0 = arith.constant 0 : i32
    %c0_i32_1 = arith.constant 0 : i32
    return %c0_i32, %c0_i32_0 : i32, i32
  }
  func.func @transform_2(%arg0: i32) -> (i32, i32) {
    %c0_i32 = arith.constant 0 : i32
    %c0_i32_0 = arith.constant 0 : i32
    %c0_i32_1 = arith.constant 0 : i32
    return %c0_i32, %c0_i32_0 : i32, i32
  }
  func.func @transform_3(%arg0: i32) -> (i32, i32) {
    %c0_i32 = arith.constant 0 : i32
    %c0_i32_0 = arith.constant 0 : i32
    return %arg0, %c0_i32 : i32, i32
  }
}

</mosaic_0001>

<llo_original>
// kernel: tpu_custom_call.1
$region0: #{tpu_custom_call.1}
  #allocation0 [shape = 'u32[]', space=smem, size = 0x4, offset = 0x4, fixed_abs, tag = 'smem constant byte address 0x4 - core index']
  #allocation1 [shape = 'u32[144,128]{1,0:T(1,128)}', space=vmem, size = 0x12000, scoped, tag = 'internal scratch']
  %s0 = inlined_call_operand.vmem [shape: f32[32,64], index: 0, kind: input, shape index: {}]
  %s1 = inlined_call_operand.vmem [shape: f32[64,32], index: 1, kind: input, shape index: {}]
  %s2 = inlined_call_operand.vmem [shape: f32[1,32], index: 2, kind: input, shape index: {}]
  %s3 = inlined_call_operand.hbm [shape: f32[32,32], index: 3, kind: output, shape index: {}]
  %s4 = sld [smem:[#allocation0]]
  $region22: #{tpu_custom_call.1} parent=0
    _
  %s6 = ssub.s32 1, %s4
  %s7 = scalar_select 0, %s6, %s4
  $region1: #{tpu_custom_call.1} parent=0
    #allocation2 [shape = 'u8[16384]{0}', space=vmem, size = 0x4000, scoped, tag = 'output window, operand 0, single buffered']
    #allocation3 [shape = 's32[1]{0}', space=sflag, size = 0x4, scoped, tag = 'scoped memory for tpu_custom_call.1']
    %8 = vsyncpa [#allocation3], 0
    // Predicated region
    $region2: #{tpu_custom_call.1} parent=1 // pred_check
      _
    $region3: #{tpu_custom_call.1} parent=1 // pred_check_branch
      %10 = sbr.rel (0) target = $region5
    $region4: #{tpu_custom_call.1} parent=1 // pred_region
      _
    $region5: #{tpu_custom_call.1} parent=1 // pred_fallthru
      _
    // Predicated region
    $region6: #{tpu_custom_call.1} parent=1 // pred_check
      _
    $region7: #{tpu_custom_call.1} parent=1 // pred_check_branch
      %12 = sbr.rel (0) target = $region9
    $region8: #{tpu_custom_call.1} parent=1 // pred_region
      _
    $region9: #{tpu_custom_call.1} parent=1 // pred_fallthru
      _
    // Predicated region
    $region10: #{tpu_custom_call.1} parent=1 // pred_check
      _
    $region11: #{tpu_custom_call.1} parent=1 // pred_check_branch
      %14 = sbr.rel (0) target = $region13
    $region12: #{tpu_custom_call.1} parent=1 // pred_region
      _
    $region13: #{tpu_custom_call.1} parent=1 // pred_fallthru
      _
    %v15 = vld [vmem:[%s0] sm:$0xff]
    %v16 = vld [vmem:[%s0 + $0x8] sm:$0xff]
    %v17 = vld [vmem:[%s0 + $0x10] sm:$0xff]
    %v18 = vld [vmem:[%s0 + $0x18] sm:$0xff]
    %vm19 = vcmask 523264
    %v20 = vsel %vm19, %v15, 0.0
    %21 = vadd.xlane.f32.xlu0 %v20
    %v22 = vpop.xlane.xlu0 %21
    %v23 = vsel %vm19, %v16, 0.0
    %24 = vadd.xlane.f32.xlu0 %v23
    %v25 = vpop.xlane.xlu0 %24
    %v26 = vsel %vm19, %v17, 0.0
    %27 = vadd.xlane.f32.xlu0 %v26
    %v28 = vpop.xlane.xlu0 %27
    %v29 = vsel %vm19, %v18, 0.0
    %30 = vadd.xlane.f32.xlu0 %v29
    %v31 = vpop.xlane.xlu0 %30
    %v32 = vmul.f32 %v22, 0.015625
    %v33 = vmul.f32 %v25, 0.015625
    %v34 = vmul.f32 %v28, 0.015625
    %v35 = vmul.f32 %v31, 0.015625
    %v36 = vsub.f32 %v15, %v32
    %v37 = vsub.f32 %v16, %v33
    %v38 = vsub.f32 %v17, %v34
    %v39 = vsub.f32 %v18, %v35
    %v40 = vmul.f32 %v36, %v36
    %v41 = vmul.f32 %v37, %v37
    %v42 = vmul.f32 %v38, %v38
    %v43 = vmul.f32 %v39, %v39
    %v44 = vsel %vm19, %v40, 0.0
    %45 = vadd.xlane.f32.xlu0 %v44
    %v46 = vpop.xlane.xlu0 %45
    %v47 = vsel %vm19, %v41, 0.0
    %48 = vadd.xlane.f32.xlu0 %v47
    %v49 = vpop.xlane.xlu0 %48
    %v50 = vsel %vm19, %v42, 0.0
    %51 = vadd.xlane.f32.xlu0 %v50
    %v52 = vpop.xlane.xlu0 %51
    %v53 = vsel %vm19, %v43, 0.0
    %54 = vadd.xlane.f32.xlu0 %v53
    %v55 = vpop.xlane.xlu0 %54
    %v56 = vmul.f32 %v46, 0.015625
    %v57 = vmul.f32 %v49, 0.015625
    %v58 = vmul.f32 %v52, 0.015625
    %v59 = vmul.f32 %v55, 0.015625
    %v60 = vadd.f32 %v56, 1e-05
    %v61 = vadd.f32 %v57, 1e-05
    %v62 = vadd.f32 %v58, 1e-05
    %v63 = vadd.f32 %v59, 1e-05
    %v64 = vrsqrt.pop %v60
    %v65 = vrsqrt.pop %v61
    %v66 = vrsqrt.pop %v62
    %v67 = vrsqrt.pop %v63
    %v68 = vmul.f32 %v36, %v64
    %v69 = vmul.f32 %v37, %v65
    %v70 = vmul.f32 %v38, %v66
    %v71 = vmul.f32 %v39, %v67
    %v72 = vld [vmem:[%s1] sm:$0xff]
    %v73 = vld [vmem:[%s1 + $0x8] sm:$0xff]
    %v74 = vld [vmem:[%s1 + $0x10] sm:$0xff]
    %v75 = vld [vmem:[%s1 + $0x18] sm:$0xff]
    %v76 = vld [vmem:[%s1 + $0x20] sm:$0xff]
    %v77 = vld [vmem:[%s1 + $0x28] sm:$0xff]
    %v78 = vld [vmem:[%s1 + $0x30] sm:$0xff]
    %v79 = vld [vmem:[%s1 + $0x38] sm:$0xff]
    %v80 = vld [vmem:[%s2] sm:$0x1]
    %v82 = vlaneseq
    %v83 = vshrl.u32 %v82, 7
    %v84 = vsub.s32 0, %v83
    %v85 = vrot.slane %v80, %v84
    %v88 = vsel %vm19, %v68, 0
    %v91 = vsel %vm19, %v69, 0
    %v94 = vsel %vm19, %v70, 0
    %v97 = vsel %vm19, %v71, 0
    %99 = vmatprep.subr.mxu0 0.0
    %100 = vmatpush1.msra.mxu0 0.0
    %101 = vmatprep.subr.mxu0 0.0
    %102 = vmatpush1.msra.mxu0 0.0
    %103 = vmatprep.subr.mxu0 0.0
    %104 = vmatpush1.msra.mxu0 0.0
    %105 = vmatprep.subr.mxu0 0.0
    %106 = vmatpush1.msra.mxu0 0.0
    %107 = vmatprep.subr.mxu0 0.0
    %108 = vmatpush1.msra.mxu0 0.0
    %109 = vmatprep.subr.mxu0 0.0
    %110 = vmatpush1.msra.mxu0 0.0
    %111 = vmatprep.subr.mxu0 0.0
    %112 = vmatpush1.msra.mxu0 0.0
    %113 = vmatprep.subr.mxu0 0.0
    %114 = vmatpush1.msra.mxu0 0.0
    %115 = vmatprep.subr.mxu0 0.0
    %116 = vmatpush1.msra.mxu0 %v79
    %117 = vmatprep.subr.mxu0 0.0
    %118 = vmatpush1.msra.mxu0 %v78
    %119 = vmatprep.subr.mxu0 0.0
    %120 = vmatpush1.msra.mxu0 %v77
    %121 = vmatprep.subr.mxu0 0.0
    %122 = vmatpush1.msra.mxu0 %v76
    %123 = vmatprep.subr.mxu0 0.0
    %124 = vmatpush1.msra.mxu0 %v75
    %125 = vmatprep.subr.mxu0 0.0
    %126 = vmatpush1.msra.mxu0 %v74
    %127 = vmatprep.subr.mxu0 0.0
    %128 = vmatpush1.msra.mxu0 %v73
    %129 = vmatprep.subr.mxu0 0.0
    %130 = vmatpush1.msra.mxu0 %v72
    %131 = vmatprep.subr.mxu0 0.0
    %132 = vmatpush2.msra.mxu0 0.0
    %133 = vmatprep.subr.mxu0 0.0
    %134 = vmatpush2.msra.mxu0 0.0
    %135 = vmatprep.subr.mxu0 0.0
    %136 = vmatpush2.msra.mxu0 0.0
    %137 = vmatprep.subr.mxu0 0.0
    %138 = vmatpush2.msra.mxu0 0.0
    %139 = vmatprep.subr.mxu0 0.0
    %140 = vmatpush2.msra.mxu0 0.0
    %141 = vmatprep.subr.mxu0 0.0
    %142 = vmatpush2.msra.mxu0 0.0
    %143 = vmatprep.subr.mxu0 0.0
    %144 = vmatpush2.msra.mxu0 0.0
    %145 = vmatprep.subr.mxu0 0.0
    %146 = vmatpush2.msra.mxu0 0.0
    %147 = vmatprep.subr.mxu0 0.0
    %148 = vmatpush2.msra.mxu0 0.0
    %149 = vmatprep.subr.mxu0 0.0
    %150 = vmatpush2.msra.mxu0 0.0
    %151 = vmatprep.subr.mxu0 0.0
    %152 = vmatpush2.msra.mxu0 0.0
    %153 = vmatprep.subr.mxu0 0.0
    %154 = vmatpush2.msra.mxu0 0.0
    %155 = vmatprep.subr.mxu0 0.0
    %156 = vmatpush2.msra.mxu0 0.0
    %157 = vmatprep.subr.mxu0 0.0
    %158 = vmatpush2.msra.mxu0 0.0
    %159 = vmatprep.subr.mxu0 0.0
    %160 = vmatpush2.msra.mxu0 0.0
    %161 = vmatprep.subr.mxu0 0.0
    %162 = vmatpush2.msra.mxu0 0.0
    %163 = vmatprep.mubr.f32.mxu0 0.0
    %164 = vmatmul.mubr.f32.gmra.mxu0 %v88
    %v165 = vpop.f32.mrf.mxu0
    %v166 = vadd.f32 %v85, %v165
    %v167 = vpop.f32.mrf.mxu0
    %168 = vmatprep.mubr.f32.mxu0 0.0
    %169 = vmatmul.mubr.f32.gmra.mxu0 %v91
    %v170 = vpop.f32.mrf.mxu0
    %v171 = vadd.f32 %v85, %v170
    %v172 = vpop.f32.mrf.mxu0
    %173 = vmatprep.mubr.f32.mxu0 0.0
    %174 = vmatmul.mubr.f32.gmra.mxu0 %v94
    %v175 = vpop.f32.mrf.mxu0
    %v176 = vadd.f32 %v85, %v175
    %v177 = vpop.f32.mrf.mxu0
    %178 = vmatprep.mubr.f32.mxu0 0.0
    %179 = vmatmul.mubr.f32.gmra.mxu0 %v97
    %v180 = vpop.f32.mrf.mxu0
    %v181 = vadd.f32 %v85, %v180
    %v182 = vpop.f32.mrf.mxu0
    %183 = vdwg.mxu0
    %vm184 = vcmask 261120
    %185 = vst.msk [vmem:[#allocation2] sm:$0xff] %vm184, %v166
    %186 = vst.msk [vmem:[#allocation2 + $0x8] sm:$0xff] %vm184, %v171
    %187 = vst.msk [vmem:[#allocation2 + $0x10] sm:$0xff] %vm184, %v176
    %188 = vst.msk [vmem:[#allocation2 + $0x18] sm:$0xff] %vm184, %v181
    // Predicated region
    $region14: #{tpu_custom_call.1} parent=1 // pred_check
      _
    $region15: #{tpu_custom_call.1} parent=1 // pred_check_branch
      %190 = sbr.rel (0) target = $region17
    $region16: #{tpu_custom_call.1} parent=1 // pred_region
      %s192 = ssub.s32 512, 512
      %193 = vsyncadd [#allocation3], %s192
      %s194 = sshll.u32 [#allocation2], 4
      %s195 = int_to_ptr.vmem [resolvable:$true] %s194
      %200 = dma.vmem_to_hbm [thread:$0]  %s195, 512, %s3, [#allocation3], 128, 128, 8
    $region17: #{tpu_custom_call.1} parent=1 // pred_fallthru
      _
    // Predicated region
    $region18: #{tpu_custom_call.1} parent=1 // pred_check
      _
    $region19: #{tpu_custom_call.1} parent=1 // pred_check_branch
      %202 = sbr.rel (0) target = $region21
    $region20: #{tpu_custom_call.1} parent=1 // pred_region
      %203 = dma.done [#allocation3], 512
    $region21: #{tpu_custom_call.1} parent=1 // pred_fallthru
      _
    %204 = vsyncpa [#allocation3], 1

// kernel: tpu_custom_call.1
$region0: #{tpu_custom_call.1}
  #allocation0 [shape = 'u32[]', space=smem, size = 0x4, offset = 0x4, fixed_abs, tag = 'smem constant byte address 0x4 - core index']
  #allocation1 [shape = 'u32[144,128]{1,0:T(1,128)}', space=vmem, size = 0x12000, scoped, tag = 'internal scratch']
  %s0 = inlined_call_operand.vmem [shape: f32[32,64], index: 0, kind: input, shape index: {}]
  %s1 = inlined_call_operand.vmem [shape: f32[64,32], index: 1, kind: input, shape index: {}]
  %s2 = inlined_call_operand.vmem [shape: f32[1,32], index: 2, kind: input, shape index: {}]
  %s3 = inlined_call_operand.hbm [shape: f32[32,32], index: 3, kind: output, shape index: {}]
  %s4 = sld [smem:[#allocation0]]
  $region22: #{tpu_custom_call.1} parent=0
    _
  %s6 = ssub.s32 1, %s4
  %s7 = scalar_select 0, %s6, %s4
  $region1: #{tpu_custom_call.1} parent=0
    #allocation2 [shape = 'u8[16384]{0}', space=vmem, size = 0x4000, scoped, tag = 'output window, operand 0, single buffered']
    #allocation3 [shape = 's32[1]{0}', space=sflag, size = 0x4, scoped, tag = 'scoped memory for tpu_custom_call.1']
    %8 = vsyncpa [#allocation3], 0
    // Predicated region
    $region2: #{tpu_custom_call.1} parent=1 // pred_check
      _
    $region3: #{tpu_custom_call.1} parent=1 // pred_check_branch
      %10 = sbr.rel (0) target = $region5
    $region4: #{tpu_custom_call.1} parent=1 // pred_region
      _
    $region5: #{tpu_custom_call.1} parent=1 // pred_fallthru
      _
    // Predicated region
    $region6: #{tpu_custom_call.1} parent=1 // pred_check
      _
    $region7: #{tpu_custom_call.1} parent=1 // pred_check_branch
      %12 = sbr.rel (0) target = $region9
    $region8: #{tpu_custom_call.1} parent=1 // pred_region
      _
    $region9: #{tpu_custom_call.1} parent=1 // pred_fallthru
      _
    // Predicated region
    $region10: #{tpu_custom_call.1} parent=1 // pred_check
      _
    $region11: #{tpu_custom_call.1} parent=1 // pred_check_branch
      %14 = sbr.rel (0) target = $region13
    $region12: #{tpu_custom_call.1} parent=1 // pred_region
      _
    $region13: #{tpu_custom_call.1} parent=1 // pred_fallthru
      _
    %v15 = vld [vmem:[%s0] sm:$0xff]
    %v16 = vld [vmem:[%s0 + $0x8] sm:$0xff]
    %v17 = vld [vmem:[%s0 + $0x10] sm:$0xff]
    %v18 = vld [vmem:[%s0 + $0x18] sm:$0xff]
    %vm19 = vcmask 523264
    %v20 = vsel %vm19, %v15, 0.0
    %21 = vadd.xlane.f32.xlu0 %v20
    %v22 = vpop.xlane.xlu0 %21
    %v23 = vsel %vm19, %v16, 0.0
    %24 = vadd.xlane.f32.xlu0 %v23
    %v25 = vpop.xlane.xlu0 %24
    %v26 = vsel %vm19, %v17, 0.0
    %27 = vadd.xlane.f32.xlu0 %v26
    %v28 = vpop.xlane.xlu0 %27
    %v29 = vsel %vm19, %v18, 0.0
    %30 = vadd.xlane.f32.xlu0 %v29
    %v31 = vpop.xlane.xlu0 %30
    %v32 = vmul.f32 %v22, 0.015625
    %v33 = vmul.f32 %v25, 0.015625
    %v34 = vmul.f32 %v28, 0.015625
    %v35 = vmul.f32 %v31, 0.015625
    %v36 = vsub.f32 %v15, %v32
    %v37 = vsub.f32 %v16, %v33
    %v38 = vsub.f32 %v17, %v34
    %v39 = vsub.f32 %v18, %v35
    %v40 = vmul.f32 %v36, %v36
    %v41 = vmul.f32 %v37, %v37
    %v42 = vmul.f32 %v38, %v38
    %v43 = vmul.f32 %v39, %v39
    %v44 = vsel %vm19, %v40, 0.0
    %45 = vadd.xlane.f32.xlu0 %v44
    %v46 = vpop.xlane.xlu0 %45
    %v47 = vsel %vm19, %v41, 0.0
    %48 = vadd.xlane.f32.xlu0 %v47
    %v49 = vpop.xlane.xlu0 %48
    %v50 = vsel %vm19, %v42, 0.0
    %51 = vadd.xlane.f32.xlu0 %v50
    %v52 = vpop.xlane.xlu0 %51
    %v53 = vsel %vm19, %v43, 0.0
    %54 = vadd.xlane.f32.xlu0 %v53
    %v55 = vpop.xlane.xlu0 %54
    %v56 = vmul.f32 %v46, 0.015625
    %v57 = vmul.f32 %v49, 0.015625
    %v58 = vmul.f32 %v52, 0.015625
    %v59 = vmul.f32 %v55, 0.015625
    %v60 = vadd.f32 %v56, 1e-05
    %v61 = vadd.f32 %v57, 1e-05
    %v62 = vadd.f32 %v58, 1e-05
    %v63 = vadd.f32 %v59, 1e-05
    %v64 = vrsqrt.pop %v60
    %v65 = vrsqrt.pop %v61
    %v66 = vrsqrt.pop %v62
    %v67 = vrsqrt.pop %v63
    %v68 = vmul.f32 %v36, %v64
    %v69 = vmul.f32 %v37, %v65
    %v70 = vmul.f32 %v38, %v66
    %v71 = vmul.f32 %v39, %v67
    %v72 = vld [vmem:[%s1] sm:$0xff]
    %v73 = vld [vmem:[%s1 + $0x8] sm:$0xff]
    %v74 = vld [vmem:[%s1 + $0x10] sm:$0xff]
    %v75 = vld [vmem:[%s1 + $0x18] sm:$0xff]
    %v76 = vld [vmem:[%s1 + $0x20] sm:$0xff]
    %v77 = vld [vmem:[%s1 + $0x28] sm:$0xff]
    %v78 = vld [vmem:[%s1 + $0x30] sm:$0xff]
    %v79 = vld [vmem:[%s1 + $0x38] sm:$0xff]
    %v80 = vld [vmem:[%s2] sm:$0x1]
    %v82 = vlaneseq
    %v83 = vshrl.u32 %v82, 7
    %v84 = vsub.s32 0, %v83
    %v85 = vrot.slane %v80, %v84
    %v88 = vsel %vm19, %v68, 0
    %v91 = vsel %vm19, %v69, 0
    %v94 = vsel %vm19, %v70, 0
    %v97 = vsel %vm19, %v71, 0
    %99 = vmatprep.subr.mxu0 0.0
    %100 = vmatpush1.msra.mxu0 0.0
    %101 = vmatprep.subr.mxu0 0.0
    %102 = vmatpush1.msra.mxu0 0.0
    %103 = vmatprep.subr.mxu0 0.0
    %104 = vmatpush1.msra.mxu0 0.0
    %105 = vmatprep.subr.mxu0 0.0
    %106 = vmatpush1.msra.mxu0 0.0
    %107 = vmatprep.subr.mxu0 0.0
    %108 = vmatpush1.msra.mxu0 0.0
    %109 = vmatprep.subr.mxu0 0.0
    %110 = vmatpush1.msra.mxu0 0.0
    %111 = vmatprep.subr.mxu0 0.0
    %112 = vmatpush1.msra.mxu0 0.0
    %113 = vmatprep.subr.mxu0 0.0
    %114 = vmatpush1.msra.mxu0 0.0
    %115 = vmatprep.subr.mxu0 0.0
    %116 = vmatpush1.msra.mxu0 %v79
    %117 = vmatprep.subr.mxu0 0.0
    %118 = vmatpush1.msra.mxu0 %v78
    %119 = vmatprep.subr.mxu0 0.0
    %120 = vmatpush1.msra.mxu0 %v77
    %121 = vmatprep.subr.mxu0 0.0
    %122 = vmatpush1.msra.mxu0 %v76
    %123 = vmatprep.subr.mxu0 0.0
    %124 = vmatpush1.msra.mxu0 %v75
    %125 = vmatprep.subr.mxu0 0.0
    %126 = vmatpush1.msra.mxu0 %v74
    %127 = vmatprep.subr.mxu0 0.0
    %128 = vmatpush1.msra.mxu0 %v73
    %129 = vmatprep.subr.mxu0 0.0
    %130 = vmatpush1.msra.mxu0 %v72
    %131 = vmatprep.subr.mxu0 0.0
    %132 = vmatpush2.msra.mxu0 0.0
    %133 = vmatprep.subr.mxu0 0.0
    %134 = vmatpush2.msra.mxu0 0.0
    %135 = vmatprep.subr.mxu0 0.0
    %136 = vmatpush2.msra.mxu0 0.0
    %137 = vmatprep.subr.mxu0 0.0
    %138 = vmatpush2.msra.mxu0 0.0
    %139 = vmatprep.subr.mxu0 0.0
    %140 = vmatpush2.msra.mxu0 0.0
    %141 = vmatprep.subr.mxu0 0.0
    %142 = vmatpush2.msra.mxu0 0.0
    %143 = vmatprep.subr.mxu0 0.0
    %144 = vmatpush2.msra.mxu0 0.0
    %145 = vmatprep.subr.mxu0 0.0
    %146 = vmatpush2.msra.mxu0 0.0
    %147 = vmatprep.subr.mxu0 0.0
    %148 = vmatpush2.msra.mxu0 0.0
    %149 = vmatprep.subr.mxu0 0.0
    %150 = vmatpush2.msra.mxu0 0.0
    %151 = vmatprep.subr.mxu0 0.0
    %152 = vmatpush2.msra.mxu0 0.0
    %153 = vmatprep.subr.mxu0 0.0
    %154 = vmatpush2.msra.mxu0 0.0
    %155 = vmatprep.subr.mxu0 0.0
    %156 = vmatpush2.msra.mxu0 0.0
    %157 = vmatprep.subr.mxu0 0.0
    %158 = vmatpush2.msra.mxu0 0.0
    %159 = vmatprep.subr.mxu0 0.0
    %160 = vmatpush2.msra.mxu0 0.0
    %161 = vmatprep.subr.mxu0 0.0
    %162 = vmatpush2.msra.mxu0 0.0
    %163 = vmatprep.mubr.f32.mxu0 0.0
    %164 = vmatmul.mubr.f32.gmra.mxu0 %v88
    %v165 = vpop.f32.mrf.mxu0
    %v166 = vadd.f32 %v85, %v165
    %v167 = vpop.f32.mrf.mxu0
    %168 = vmatprep.mubr.f32.mxu0 0.0
    %169 = vmatmul.mubr.f32.gmra.mxu0 %v91
    %v170 = vpop.f32.mrf.mxu0
    %v171 = vadd.f32 %v85, %v170
    %v172 = vpop.f32.mrf.mxu0
    %173 = vmatprep.mubr.f32.mxu0 0.0
    %174 = vmatmul.mubr.f32.gmra.mxu0 %v94
    %v175 = vpop.f32.mrf.mxu0
    %v176 = vadd.f32 %v85, %v175
    %v177 = vpop.f32.mrf.mxu0
    %178 = vmatprep.mubr.f32.mxu0 0.0
    %179 = vmatmul.mubr.f32.gmra.mxu0 %v97
    %v180 = vpop.f32.mrf.mxu0
    %v181 = vadd.f32 %v85, %v180
    %v182 = vpop.f32.mrf.mxu0
    %183 = vdwg.mxu0
    %vm184 = vcmask 261120
    %185 = vst.msk [vmem:[#allocation2] sm:$0xff] %vm184, %v166
    %186 = vst.msk [vmem:[#allocation2 + $0x8] sm:$0xff] %vm184, %v171
    %187 = vst.msk [vmem:[#allocation2 + $0x10] sm:$0xff] %vm184, %v176
    %188 = vst.msk [vmem:[#allocation2 + $0x18] sm:$0xff] %vm184, %v181
    // Predicated region
    $region14: #{tpu_custom_call.1} parent=1 // pred_check
      _
    $region15: #{tpu_custom_call.1} parent=1 // pred_check_branch
      %190 = sbr.rel (0) target = $region17
    $region16: #{tpu_custom_call.1} parent=1 // pred_region
      %s192 = ssub.s32 512, 512
      %193 = vsyncadd [#allocation3], %s192
      %s194 = sshll.u32 [#allocation2], 4
      %s195 = int_to_ptr.vmem [resolvable:$true] %s194
      %200 = dma.vmem_to_hbm [thread:$0]  %s195, 512, %s3, [#allocation3], 128, 128, 8
    $region17: #{tpu_custom_call.1} parent=1 // pred_fallthru
      _
    // Predicated region
    $region18: #{tpu_custom_call.1} parent=1 // pred_check
      _
    $region19: #{tpu_custom_call.1} parent=1 // pred_check_branch
      %202 = sbr.rel (0) target = $region21
    $region20: #{tpu_custom_call.1} parent=1 // pred_region
      %203 = dma.done [#allocation3], 512
    $region21: #{tpu_custom_call.1} parent=1 // pred_fallthru
      _
    %204 = vsyncpa [#allocation3], 1

</llo_original>
